<compile_context>
chip_gen: v6e
topology: v6e:2x2x1
jax: 0.10.0
libtpu: 0.0.40
codegen_flags: <defaults>
</compile_context>

<pallas_src>
import numpy as np
import jax
import jax.numpy as jnp
from jax import lax
from jax.experimental import pallas as pl
from jax.experimental.pallas import tpu as pltpu

# Fixed (non-trainable) conv weights, exactly as in the PyTorch __init__.
KERNEL_V = np.array([[0, -1, 0],
                     [0,  0, 0],
                     [0,  1, 0]], dtype=np.float32)
KERNEL_H = np.array([[ 0, 0, 0],
                     [-1, 0, 1],
                     [ 0, 0, 0]], dtype=np.float32)
EPS = 1e-6


def _round_up(a, b):
    return (a + b - 1) // b * b


def _make_grad_kernel(K, H, W, Ho, Wo):
    """Kernel processing K (batch*channel) planes per grid step.

    x_ref  : unpadded input planes, (K, H, W)    (any float dtype)
    o_ref  : output planes,         (K, Ho, Wo)  (= H+2, W+2), f32
    xp_ref : VMEM halo slab,        (K, Hl, Wl)  Hl >= H+4, Wl >= W+4, f32
    """

    def grad_kernel(x_ref, o_ref, xp_ref):
        # --- Build the conv2d(padding=2) halo in VMEM ---------------------
        # Zero ONLY the 2-wide border strips the stencil windows read
        # (rows 0..1 / H+2..H+3 over cols 0..W+3, cols 0..1 / W+2..W+3 over
        # rows 2..H+1).  Cols >= W+4 / rows >= H+4 (alignment padding) are
        # never read and need no zeroing.  Done every step so it is safe
        # under v7x megacore grid splitting.
        zrow = jnp.zeros((K, 2, W + 4), jnp.float32)
        zcol = jnp.zeros((K, H, 2), jnp.float32)
        xp_ref[:, 0:2, 0:W + 4] = zrow
        xp_ref[:, H + 2:H + 4, 0:W + 4] = zrow
        xp_ref[:, 2:H + 2, 0:2] = zcol
        xp_ref[:, 2:H + 2, W + 2:W + 4] = zcol

        # Drop the unpadded plane at offset (2, 2); single cast to f32.
        # TODO(synk): replace this VMEM->VMEM insert with a manual DMA
        # straight into the slab interior (memory_space=pl.ANY +
        # make_async_copy); the cross-step prefetch state machine needed for
        # that is unsafe under the "parallel" grid split, so it needs a
        # core_map-based variant.
        xp_ref[:, 2:2 + H, 2:2 + W] = x_ref[...].astype(jnp.float32)

        # --- Stencils ------------------------------------------------------
        # Read the four windows directly off the ref (no full-slab load, so
        # the Wl lane padding never travels through vregs).
        # Vertical [[0,-1,0],[0,0,0],[0,1,0]]: v[i,j] = xp[i+2,j+1] - xp[i,j+1]
        v = xp_ref[:, 2:2 + Ho, 1:1 + Wo] - xp_ref[:, 0:Ho, 1:1 + Wo]
        # Horizontal [[0,0,0],[-1,0,1],[0,0,0]]: h[i,j] = xp[i+1,j+2] - xp[i+1,j]
        h = xp_ref[:, 1:1 + Ho, 2:2 + Wo] - xp_ref[:, 1:1 + Ho, 0:Wo]

        # Single store per output block.
        o_ref[...] = jnp.sqrt(v * v + h * h + EPS)

    return grad_kernel


def _vmem_limit_and_budget():
    """Scoped-VMEM limit and per-step tile budget per TPU generation."""
    cap = None
    try:
        cap = getattr(pltpu.get_tpu_info(), "vmem_capacity_bytes", None)
    except Exception:
        cap = None
    if not cap:
        cap = 64 << 20                        # conservative: v7x per-TC VMEM
    limit = min(100 << 20, (cap * 3) // 4)    # ~96 MiB on v5e/v6e, ~48 MiB on v7x
    budget = max(limit - (12 << 20), 4 << 20)  # headroom for compiler scratch
    return int(limit), int(budget)


def _choose_planes_per_step(n_planes, per_plane_bytes, budget_bytes):
    """Pick K planes/step: a divisor of n_planes fitting the VMEM budget that
    minimizes work on the busier of v7x's two TensorCores (the grid axis is
    "parallel"), with a small per-step-overhead penalty.  On single-core
    chips this is mildly conservative but still yields large blocks."""
    k_max = max(1, budget_bytes // max(per_plane_bytes, 1))
    best_k, best_score = 1, None
    for k in range(1, n_planes + 1):
        if n_planes % k != 0 or k > k_max:
            continue
        steps = n_planes // k
        score = (-(-steps // 2)) * k + 0.25 * steps
        if (best_score is None or score < best_score
                or (score == best_score and k > best_k)):
            best_score, best_k = score, k
    return best_k


def get_gradient(x):
    """Pallas equivalent of Get_gradient.forward. x: (B, 3, H, W) NCHW."""
    B, C, H, W = x.shape
    assert C == 3, "Get_gradient expects exactly 3 input channels"

    Ho, Wo = H + 2, W + 2            # conv2d padding=2 with 3x3 kernel
    Hl = _round_up(H + 4, 8)         # halo slab, sublane-aligned
    Wl = _round_up(W + 4, 128)       # halo slab, lane-aligned
    N = B * C                        # independent planes

    vmem_limit, budget = _vmem_limit_and_budget()

    # Per-plane VMEM cost: double-buffered in + out blocks + halo slab.
    per_plane_bytes = (2 * H * W * x.dtype.itemsize
                       + 2 * Ho * Wo * 4
                       + Hl * Wl * 4)
    K = _choose_planes_per_step(N, per_plane_bytes, budget)
    # TODO(synk): add row-band tiling (2-row input halo) so multi-megapixel
    # planes (1080p/4K) never exceed v7x's 64 MiB VMEM and supply >=4 steps.
    # TODO(synk): offer a lane-dense (N, Ho, round_up(Wo,128)) output variant
    # when the consumer can fuse the crop; exact Wo keeps a masked tail store.

    x_flat = x.reshape(N, H, W)      # contiguous reshape, no HBM copy

    out_flat = pl.pallas_call(
        _make_grad_kernel(K, H, W, Ho, Wo),
        out_shape=jax.ShapeDtypeStruct((N, Ho, Wo), jnp.float32),
        grid=(N // K,),
        # Blocks cover K planes; last two dims equal the full array dims.
        in_specs=[pl.BlockSpec((K, H, W), lambda i: (i, 0, 0))],
        out_specs=pl.BlockSpec((K, Ho, Wo), lambda i: (i, 0, 0)),
        scratch_shapes=[pltpu.VMEM((K, Hl, Wl), jnp.float32)],
        compiler_params=pltpu.CompilerParams(
            dimension_semantics=("parallel",),
            vmem_limit_bytes=vmem_limit),
    )(x_flat)

    return out_flat.reshape(B, C, Ho, Wo)


def _reference(x):
    """Pure-JAX reference using lax conv, mirroring the PyTorch forward."""
    x = x.astype(jnp.float32)
    wv = jnp.asarray(KERNEL_V)[None, None]  # OIHW (1,1,3,3)
    wh = jnp.asarray(KERNEL_H)[None, None]

    def conv(inp, w):
        return lax.conv_general_dilated(
            inp, w, window_strides=(1, 1), padding=((2, 2), (2, 2)),
            dimension_numbers=("NCHW", "OIHW", "NCHW"))

    outs = []
    for c in range(3):
        xc = x[:, c:c + 1]  # (B,1,H,W)
        v = conv(xc, wv)
        h = conv(xc, wh)
        outs.append(jnp.sqrt(v * v + h * h + EPS))
    return jnp.concatenate(outs, axis=1)


if __name__ == "__main__":
    key = jax.random.PRNGKey(0)

    for shape in [(2, 3, 16, 16), (1, 3, 20, 33)]:
        x = jax.random.normal(key, shape, dtype=jnp.float32)

        out = jax.block_until_ready(jax.jit(get_gradient)(x))
        ref = jax.block_until_ready(_reference(x))

        expected = (shape[0], 3, shape[2] + 2, shape[3] + 2)
        assert out.shape == expected, (out.shape, expected)
        if not np.allclose(np.asarray(out), np.asarray(ref),
                           atol=1e-5, rtol=1e-5):
            raise AssertionError(f"Pallas output mismatch for shape {shape}")

    print("KERNEL_OK")
</pallas_src>

<mosaic_0001>
module attributes {stable_mosaic.version = 11 : i64} {
  func.func @grad_kernel(%arg0: i32, %arg1: memref<3x16x16xf32, #tpu.memory_space<vmem>>, %arg2: memref<3x18x18xf32, #tpu.memory_space<vmem>>, %arg3: memref<3x24x128xf32, #tpu.memory_space<vmem>>) attributes {dimension_semantics = [#tpu.dimension_semantics<parallel>], iteration_bounds = array<i64: 2>, scalar_prefetch = 0 : i64, scratch_operands = 1 : i64, tpu.core_type = #tpu.core_type<tc>, window_params = [{transform_indices = @transform_0, window_bounds = array<i64: 3, 16, 16>}, {transform_indices = @transform_1, window_bounds = array<i64: 3, 18, 18>}]} {
    %cst = arith.constant 0.000000e+00 : f32
    %0 = vector.broadcast %cst : f32 to vector<3x2x20xf32>
    %cst_0 = arith.constant 0.000000e+00 : f32
    %1 = vector.broadcast %cst_0 : f32 to vector<3x16x2xf32>
    %c0 = arith.constant 0 : index
    %c0_1 = arith.constant 0 : index
    %c0_2 = arith.constant 0 : index
    %2 = vector.load %arg3[%c0, %c0_1, %c0_2] : memref<3x24x128xf32, #tpu.memory_space<vmem>>, vector<3x2x20xf32>
    tpu.vector_store %arg3[%c0, %c0_1, %c0_2], %0 {strides = array<i32>} : memref<3x24x128xf32, #tpu.memory_space<vmem>>, vector<3x2x20xf32>,
    %c0_3 = arith.constant 0 : index
    %c18 = arith.constant 18 : index
    %c0_4 = arith.constant 0 : index
    %3 = vector.load %arg3[%c0_3, %c18, %c0_4] : memref<3x24x128xf32, #tpu.memory_space<vmem>>, vector<3x2x20xf32>
    tpu.vector_store %arg3[%c0_3, %c18, %c0_4], %0 {strides = array<i32>} : memref<3x24x128xf32, #tpu.memory_space<vmem>>, vector<3x2x20xf32>,
    %c0_5 = arith.constant 0 : index
    %c2 = arith.constant 2 : index
    %c0_6 = arith.constant 0 : index
    %4 = vector.load %arg3[%c0_5, %c2, %c0_6] : memref<3x24x128xf32, #tpu.memory_space<vmem>>, vector<3x16x2xf32>
    tpu.vector_store %arg3[%c0_5, %c2, %c0_6], %1 {strides = array<i32>} : memref<3x24x128xf32, #tpu.memory_space<vmem>>, vector<3x16x2xf32>,
    %c0_7 = arith.constant 0 : index
    %c2_8 = arith.constant 2 : index
    %c18_9 = arith.constant 18 : index
    %5 = vector.load %arg3[%c0_7, %c2_8, %c18_9] : memref<3x24x128xf32, #tpu.memory_space<vmem>>, vector<3x16x2xf32>
    tpu.vector_store %arg3[%c0_7, %c2_8, %c18_9], %1 {strides = array<i32>} : memref<3x24x128xf32, #tpu.memory_space<vmem>>, vector<3x16x2xf32>,
    %c0_10 = arith.constant 0 : index
    %c0_11 = arith.constant 0 : index
    %c0_12 = arith.constant 0 : index
    %6 = vector.load %arg1[%c0_10, %c0_11, %c0_12] : memref<3x16x16xf32, #tpu.memory_space<vmem>>, vector<3x16x16xf32>
    %c0_13 = arith.constant 0 : index
    %c2_14 = arith.constant 2 : index
    %c2_15 = arith.constant 2 : index
    %7 = vector.load %arg3[%c0_13, %c2_14, %c2_15] : memref<3x24x128xf32, #tpu.memory_space<vmem>>, vector<3x16x16xf32>
    tpu.vector_store %arg3[%c0_13, %c2_14, %c2_15], %6 {strides = array<i32>} : memref<3x24x128xf32, #tpu.memory_space<vmem>>, vector<3x16x16xf32>,
    %c0_16 = arith.constant 0 : index
    %c2_17 = arith.constant 2 : index
    %c1 = arith.constant 1 : index
    %8 = vector.load %arg3[%c0_16, %c2_17, %c1] : memref<3x24x128xf32, #tpu.memory_space<vmem>>, vector<3x18x18xf32>
    %c0_18 = arith.constant 0 : index
    %c0_19 = arith.constant 0 : index
    %c1_20 = arith.constant 1 : index
    %9 = vector.load %arg3[%c0_18, %c0_19, %c1_20] : memref<3x24x128xf32, #tpu.memory_space<vmem>>, vector<3x18x18xf32>
    %10 = arith.subf %8, %9 : vector<3x18x18xf32>
    %c0_21 = arith.constant 0 : index
    %c1_22 = arith.constant 1 : index
    %c2_23 = arith.constant 2 : index
    %11 = vector.load %arg3[%c0_21, %c1_22, %c2_23] : memref<3x24x128xf32, #tpu.memory_space<vmem>>, vector<3x18x18xf32>
    %c0_24 = arith.constant 0 : index
    %c1_25 = arith.constant 1 : index
    %c0_26 = arith.constant 0 : index
    %12 = vector.load %arg3[%c0_24, %c1_25, %c0_26] : memref<3x24x128xf32, #tpu.memory_space<vmem>>, vector<3x18x18xf32>
    %13 = arith.subf %11, %12 : vector<3x18x18xf32>
    %14 = arith.mulf %10, %10 : vector<3x18x18xf32>
    %15 = arith.mulf %13, %13 : vector<3x18x18xf32>
    %16 = arith.addf %14, %15 : vector<3x18x18xf32>
    %cst_27 = arith.constant 9.99999997E-7 : f32
    %17 = vector.broadcast %cst_27 : f32 to vector<3x18x18xf32>
    %18 = arith.addf %16, %17 : vector<3x18x18xf32>
    %19 = math.sqrt %18 : vector<3x18x18xf32>
    %c0_28 = arith.constant 0 : index
    %c0_29 = arith.constant 0 : index
    %c0_30 = arith.constant 0 : index
    %20 = vector.load %arg2[%c0_28, %c0_29, %c0_30] : memref<3x18x18xf32, #tpu.memory_space<vmem>>, vector<3x18x18xf32>
    tpu.vector_store %arg2[%c0_28, %c0_29, %c0_30], %19 {strides = array<i32>} : memref<3x18x18xf32, #tpu.memory_space<vmem>>, vector<3x18x18xf32>,
    return
  }
  func.func @transform_0(%arg0: i32) -> (i32, i32, i32) {
    %c0_i32 = arith.constant 0 : i32
    %c0_i32_0 = arith.constant 0 : i32
    %c0_i32_1 = arith.constant 0 : i32
    return %arg0, %c0_i32, %c0_i32_0 : i32, i32, i32
  }
  func.func @transform_1(%arg0: i32) -> (i32, i32, i32) {
    %c0_i32 = arith.constant 0 : i32
    %c0_i32_0 = arith.constant 0 : i32
    %c0_i32_1 = arith.constant 0 : i32
    return %arg0, %c0_i32, %c0_i32_0 : i32, i32, i32
  }
}

</mosaic_0001>

<llo_original>
// kernel: get_gradient.1
$region0: #{get_gradient.1}
  #allocation0 [shape = 'u32[]', space=smem, size = 0x4, offset = 0x4, fixed_abs, tag = 'smem constant byte address 0x4 - core index']
  #allocation1 [shape = 'u32[144,128]{1,0:T(1,128)}', space=vmem, size = 0x12000, scoped, tag = 'internal scratch']
  #allocation2 [shape = 'f32[3,24,128]{2,1,0:T(8,128)}', space=vmem, size = 0x9000, scoped, tag = 'scratch operand']
  %s0 = inlined_call_operand.hbm [shape: f32[6,16,16], index: 0, kind: input, shape index: {}]
  %s1 = inlined_call_operand.vmem [shape: f32[6,18,18], index: 1, kind: output, shape index: {}]
  %s2 = sld [smem:[#allocation0]]
  $region41: #{get_gradient.1} parent=0
    _
  %s4 = ssub.s32 1, %s2
  %s5 = scalar_select 0, %s4, %s2
  $region1: #{get_gradient.1} parent=0
    #allocation3 [shape = 'u8[49152]{0}', space=vmem, size = 0xc000, scoped, tag = 'input window, operand 0']
    #allocation4 [shape = 's32[2]{0}', space=sflag, size = 0x8, scoped, tag = 'scoped memory for get_gradient.1']
    %6 = vsyncpa [#allocation4], 0
    %s7 = scalar_lea.sflag [#allocation4], 1
    %8 = vsyncpa %s7, 0
    loop: start=0, step=1, limit=4
    $region2: #{get_gradient.1} parent=1 // loop_pre_header
      _
    $region3: #{get_gradient.1} parent=1 // loop_header
      %s10 = sphi 0, %s14
      %p11 = scmp.ge.s32.totalorder %s10, 4
      %s20 = sphi 0, %s22
      %s23 = sphi 0, %s20
      %s24 = sphi 0, %s23
      %s40 = sphi 0, %s24
      %s46 = sphi 0, %s48
      %s49 = sphi 0, %s46
      %s50 = sphi 0, %s49
      %s66 = sphi 0, %s50
    $region4: #{get_gradient.1} parent=1 // loop_header_branch
      %13 = sbr.rel (%p11) target = $region8
    $region5: #{get_gradient.1} parent=1 // loop_body
      %s15 = ssub.s32 %s10, 1
      %s16 = ssub.s32 %s10, 2
      %s17 = sadd.s32 %s10, 1
      %s18 = ssub.s32 %s10, %s17
      %p19 = scmp.eq.s32.totalorder %s18, 0
      %s21 = sadd.s32 %s20, 1
      %s22 = scalar_select %p19, %s20, %s21
      %p25 = pneg %p19
      %p26 = scmp.eq.s32.totalorder %s10, 1
      %p27 = por %p25, %p26
      %p28 = scmp.ne.s32.totalorder %s20, %s23
      %p29 = scmp.eq.s32.totalorder %s10, 0
      %p30 = por %p28, %p29
      %p31 = scmp.ne.s32.totalorder %s20, %s23
      %p32 = scmp.eq.s32.totalorder %s15, 1
      %p33 = por %p31, %p32
      %p34 = scmp.ne.s32.totalorder %s23, %s24
      %p35 = scmp.eq.s32.totalorder %s15, 0
      %p36 = por %p34, %p35
      %p37 = scmp.ne.s32.totalorder %s23, %s24
      %p38 = scmp.eq.s32.totalorder %s16, 1
      %p39 = por %p37, %p38
      %p41 = scmp.ne.s32.totalorder %s24, %s40
      %p42 = scmp.eq.s32.totalorder %s16, 0
      %p43 = por %p41, %p42
      %s44 = ssub.s32 %s10, %s17
      %p45 = scmp.eq.s32.totalorder %s44, 0
      %s47 = sadd.s32 %s46, 1
      %s48 = scalar_select %p45, %s46, %s47
      %p51 = pneg %p45
      %p52 = scmp.eq.s32.totalorder %s10, 1
      %p53 = por %p51, %p52
      %p54 = scmp.ne.s32.totalorder %s46, %s49
      %p55 = scmp.eq.s32.totalorder %s10, 0
      %p56 = por %p54, %p55
      %p57 = scmp.ne.s32.totalorder %s46, %s49
      %p58 = scmp.eq.s32.totalorder %s15, 1
      %p59 = por %p57, %p58
      %p60 = scmp.ne.s32.totalorder %s49, %s50
      %p61 = scmp.eq.s32.totalorder %s15, 0
      %p62 = por %p60, %p61
      %p63 = scmp.ne.s32.totalorder %s49, %s50
      %p64 = scmp.eq.s32.totalorder %s16, 1
      %p65 = por %p63, %p64
      %p67 = scmp.ne.s32.totalorder %s50, %s66
      %p68 = scmp.eq.s32.totalorder %s16, 0
      %p69 = por %p67, %p68
      %p70 = scmp.le.s32.totalorder 1, %s10
      %p71 = scmp.lt.s32.totalorder %s10, 3
      %p72 = pnand %p70, %p71
      %p73 = pneg %p72
      // Predicated region
      $region9: #{get_gradient.1} parent=5 // pred_check
        _
      $region10: #{get_gradient.1} parent=5 // pred_check_branch
        %75 = sbr.rel (%p72) target = $region12
      $region11: #{get_gradient.1} parent=5 // pred_region
        %s76 = ssub.s32 %s10, 1
      $region12: #{get_gradient.1} parent=5 // pred_fallthru
        _
      %p77 = scmp.lt.s32.totalorder %s10, 2
      // Predicated region
      $region13: #{get_gradient.1} parent=5 // pred_check
        %p78 = pneg %p77
      $region14: #{get_gradient.1} parent=5 // pred_check_branch
        %80 = sbr.rel (%p78) target = $region16
      $region15: #{get_gradient.1} parent=5 // pred_region
        // Predicated region
        $region17: #{get_gradient.1} parent=15 // pred_check
          %p81 = pneg %p30
        $region18: #{get_gradient.1} parent=15 // pred_check_branch
          %83 = sbr.rel (%p81) target = $region20
        $region19: #{get_gradient.1} parent=15 // pred_region
          %s84 = sand.u32 %s20, 1
          %s85 = scalar_lea.sflag [#allocation4], %s84
          %s86 = sand.u32 %s20, 1
          %s87 = smul.addr %s86, 48
          %s88 = scalar_lea.vmem [#allocation3], %s87
          %s89 = smul.u32 3, %s10
          %s91 = ssub.s32 768, 768
          %92 = vsyncadd %s85, %s91
          %s93 = smul.addr %s89, 2
          %s94 = smul.addr %s93, 128
          %s95 = scalar_lea.hbm %s0, %s94
          %s96 = sshll.u32 %s88, 4
          %s97 = int_to_ptr.vmem [resolvable:$true] %s96
          %102 = dma.hbm_to_vmem [thread:$0]  %s95, 768, %s97, %s85, 128, 128, 8
        $region20: #{get_gradient.1} parent=15 // pred_fallthru
          _
      $region16: #{get_gradient.1} parent=5 // pred_fallthru
        _
      %p103 = scmp.le.s32.totalorder 1, %s10
      %p104 = scmp.lt.s32.totalorder %s10, 3
      %p105 = pnand %p103, %p104
      %p106 = pneg %p105
      // Predicated region
      $region21: #{get_gradient.1} parent=5 // pred_check
        _
      $region22: #{get_gradient.1} parent=5 // pred_check_branch
        %108 = sbr.rel (%p105) target = $region24
      $region23: #{get_gradient.1} parent=5 // pred_region
        %s109 = ssub.s32 %s10, 1
        %s110 = sand.u32 %s23, 1
        %s111 = scalar_lea.sflag [#allocation4], %s110
        %s112 = sand.u32 %s23, 1
        %s113 = smul.addr %s112, 48
        %s114 = scalar_lea.vmem [#allocation3], %s113
        // Predicated region
        $region25: #{get_gradient.1} parent=23 // pred_check
          %p115 = pneg %p36
        $region26: #{get_gradient.1} parent=23 // pred_check_branch
          %117 = sbr.rel (%p115) target = $region28
        $region27: #{get_gradient.1} parent=23 // pred_region
          %118 = dma.done %s111, 768
        $region28: #{get_gradient.1} parent=23 // pred_fallthru
          _
        %s119 = sand.u32 %s23, 1
        %s120 = scalar_lea.sflag [#allocation4], %s119
        %s121 = sand.u32 %s23, 1
        %s122 = smul.addr %s121, 48
        %s123 = scalar_lea.vmem [#allocation3], %s122
        %p124 = pneg %p36
        %p125 = pneg %p33
        %p126 = pneg %p62
        %p127 = pneg %p59
        %s128 = smul.u32 3, %s15
        %p129 = scmp.lt.s32.totalorder %s128, 5
        %s130 = scalar_select %p129, %s128, 5
        %s131 = smul.addr %s130, 3
        %s132 = smul.addr %s131, 8
        %s133 = scalar_lea.vmem %s1, %s132
        %s134 = smul.u32 3, %s15
        %s135 = smul.u32 3, %s15
        %p136 = scmp.lt.s32.totalorder %s135, 5
        %s137 = scalar_select %p136, %s135, 5
        %s138 = smul.addr %s137, 3
        %s139 = smul.addr %s138, 8
        %s140 = scalar_lea.vmem %s1, %s139
        %s141 = smul.u32 3, %s15
        %vm142 = vcmask 156672
        %143 = vst.msk [vmem:[#allocation2] sm:$0x3] %vm142, 0.0
        %144 = vst.msk [vmem:[#allocation2 + $0x18] sm:$0x3] %vm142, 0.0
        %145 = vst.msk [vmem:[#allocation2 + $0x30] sm:$0x3] %vm142, 0.0
        %146 = vst.msk [vmem:[#allocation2 + $0x12] sm:$0x3] %vm142, 0.0
        %147 = vst.msk [vmem:[#allocation2 + $0x2a] sm:$0x3] %vm142, 0.0
        %148 = vst.msk [vmem:[#allocation2 + $0x42] sm:$0x3] %vm142, 0.0
        %vm149 = vcmask 15360
        %150 = vst.msk [vmem:[#allocation2 + $0x2] sm:$0xff] %vm149, 0.0
        %151 = vst.msk [vmem:[#allocation2 + $0xa] sm:$0xff] %vm149, 0.0
        %152 = vst.msk [vmem:[#allocation2 + $0x1a] sm:$0xff] %vm149, 0.0
        %153 = vst.msk [vmem:[#allocation2 + $0x22] sm:$0xff] %vm149, 0.0
        %154 = vst.msk [vmem:[#allocation2 + $0x32] sm:$0xff] %vm149, 0.0
        %155 = vst.msk [vmem:[#allocation2 + $0x3a] sm:$0xff] %vm149, 0.0
        %vm156 = vcmask 162960
        %157 = vst.msk [vmem:[#allocation2 + $0x2] sm:$0xff] %vm156, 0.0
        %158 = vst.msk [vmem:[#allocation2 + $0xa] sm:$0xff] %vm156, 0.0
        %159 = vst.msk [vmem:[#allocation2 + $0x1a] sm:$0xff] %vm156, 0.0
        %160 = vst.msk [vmem:[#allocation2 + $0x22] sm:$0xff] %vm156, 0.0
        %161 = vst.msk [vmem:[#allocation2 + $0x32] sm:$0xff] %vm156, 0.0
        %162 = vst.msk [vmem:[#allocation2 + $0x3a] sm:$0xff] %vm156, 0.0
        %v163 = vld [vmem:[%s114] sm:$0xff]
        %v164 = vld [vmem:[%s114 + $0x8] sm:$0xff]
        %v165 = vld [vmem:[%s114 + $0x10] sm:$0xff]
        %v166 = vld [vmem:[%s114 + $0x18] sm:$0xff]
        %v167 = vld [vmem:[%s114 + $0x20] sm:$0xff]
        %v168 = vld [vmem:[%s114 + $0x28] sm:$0xff]
        %175 = vrot.lane.b32.xlu0 %v163, 2
        %v176 = vpop.permute.xlu0 %175
        %177 = vrot.lane.b32.xlu0 %v164, 2
        %v178 = vpop.permute.xlu0 %177
        %179 = vrot.lane.b32.xlu0 %v165, 2
        %v180 = vpop.permute.xlu0 %179
        %181 = vrot.lane.b32.xlu0 %v166, 2
        %v182 = vpop.permute.xlu0 %181
        %183 = vrot.lane.b32.xlu0 %v167, 2
        %v184 = vpop.permute.xlu0 %183
        %185 = vrot.lane.b32.xlu0 %v168, 2
        %v186 = vpop.permute.xlu0 %185
        %vm193 = vcmask 146448
        %194 = vst.msk [vmem:[#allocation2 + $0x2] sm:$0xff] %vm193, %v176
        %195 = vst.msk [vmem:[#allocation2 + $0xa] sm:$0xff] %vm193, %v178
        %196 = vst.msk [vmem:[#allocation2 + $0x1a] sm:$0xff] %vm193, %v180
        %197 = vst.msk [vmem:[#allocation2 + $0x22] sm:$0xff] %vm193, %v182
        %198 = vst.msk [vmem:[#allocation2 + $0x32] sm:$0xff] %vm193, %v184
        %199 = vst.msk [vmem:[#allocation2 + $0x3a] sm:$0xff] %vm193, %v186
        %v200 = vld [vmem:[#allocation2 + $0x2] sm:$0xff]
        %v201 = vld [vmem:[#allocation2 + $0xa] sm:$0xff]
        %v202 = vld [vmem:[#allocation2 + $0x12] sm:$0x3]
        %v203 = vld [vmem:[#allocation2 + $0x1a] sm:$0xff]
        %v204 = vld [vmem:[#allocation2 + $0x22] sm:$0xff]
        %v205 = vld [vmem:[#allocation2 + $0x2a] sm:$0x3]
        %v206 = vld [vmem:[#allocation2 + $0x32] sm:$0xff]
        %v207 = vld [vmem:[#allocation2 + $0x3a] sm:$0xff]
        %v208 = vld [vmem:[#allocation2 + $0x42] sm:$0x3]
        %v209 = vld [vmem:[#allocation2] sm:$0xff]
        %v210 = vld [vmem:[#allocation2 + $0x8] sm:$0xff]
        %v211 = vld [vmem:[#allocation2 + $0x10] sm:$0x3]
        %v212 = vld [vmem:[#allocation2 + $0x18] sm:$0xff]
        %v213 = vld [vmem:[#allocation2 + $0x20] sm:$0xff]
        %v214 = vld [vmem:[#allocation2 + $0x28] sm:$0x3]
        %v215 = vld [vmem:[#allocation2 + $0x30] sm:$0xff]
        %v216 = vld [vmem:[#allocation2 + $0x38] sm:$0xff]
        %v217 = vld [vmem:[#allocation2 + $0x40] sm:$0x3]
        %v218 = vsub.f32 %v200, %v209
        %v219 = vsub.f32 %v201, %v210
        %v220 = vsub.f32 %v202, %v211
        %v221 = vsub.f32 %v203, %v212
        %v222 = vsub.f32 %v204, %v213
        %v223 = vsub.f32 %v205, %v214
        %v224 = vsub.f32 %v206, %v215
        %v225 = vsub.f32 %v207, %v216
        %v226 = vsub.f32 %v208, %v217
        %v227 = vld [vmem:[#allocation2 + $0x1] sm:$0xff]
        %v228 = vld [vmem:[#allocation2 + $0x9] sm:$0xff]
        %v229 = vld [vmem:[#allocation2 + $0x11] sm:$0x3]
        %v230 = vld [vmem:[#allocation2 + $0x19] sm:$0xff]
        %v231 = vld [vmem:[#allocation2 + $0x21] sm:$0xff]
        %v232 = vld [vmem:[#allocation2 + $0x29] sm:$0x3]
        %v233 = vld [vmem:[#allocation2 + $0x31] sm:$0xff]
        %v234 = vld [vmem:[#allocation2 + $0x39] sm:$0xff]
        %v235 = vld [vmem:[#allocation2 + $0x41] sm:$0x3]
        %245 = vrot.lane.b32.xlu0 %v227, 2
        %v246 = vpop.permute.xlu0 %245
        %247 = vrot.lane.b32.xlu0 %v228, 2
        %v248 = vpop.permute.xlu0 %247
        %249 = vrot.lane.b32.xlu0 %v229, 2
        %v250 = vpop.permute.xlu0 %249
        %251 = vrot.lane.b32.xlu0 %v230, 2
        %v252 = vpop.permute.xlu0 %251
        %253 = vrot.lane.b32.xlu0 %v231, 2
        %v254 = vpop.permute.xlu0 %253
        %255 = vrot.lane.b32.xlu0 %v232, 2
        %v256 = vpop.permute.xlu0 %255
        %257 = vrot.lane.b32.xlu0 %v233, 2
        %v258 = vpop.permute.xlu0 %257
        %259 = vrot.lane.b32.xlu0 %v234, 2
        %v260 = vpop.permute.xlu0 %259
        %261 = vrot.lane.b32.xlu0 %v235, 2
        %v262 = vpop.permute.xlu0 %261
        %v272 = vsub.f32 %v227, %v246
        %v273 = vsub.f32 %v228, %v248
        %v274 = vsub.f32 %v229, %v250
        %v275 = vsub.f32 %v230, %v252
        %v276 = vsub.f32 %v231, %v254
        %v277 = vsub.f32 %v232, %v256
        %v278 = vsub.f32 %v233, %v258
        %v279 = vsub.f32 %v234, %v260
        %v280 = vsub.f32 %v235, %v262
        %v281 = vmul.f32 %v218, %v218
        %v282 = vmul.f32 %v219, %v219
        %v283 = vmul.f32 %v220, %v220
        %v284 = vmul.f32 %v221, %v221
        %v285 = vmul.f32 %v222, %v222
        %v286 = vmul.f32 %v223, %v223
        %v287 = vmul.f32 %v224, %v224
        %v288 = vmul.f32 %v225, %v225
        %v289 = vmul.f32 %v226, %v226
        %v290 = vmul.f32 %v272, %v272
        %v291 = vmul.f32 %v273, %v273
        %v292 = vmul.f32 %v274, %v274
        %v293 = vmul.f32 %v275, %v275
        %v294 = vmul.f32 %v276, %v276
        %v295 = vmul.f32 %v277, %v277
        %v296 = vmul.f32 %v278, %v278
        %v297 = vmul.f32 %v279, %v279
        %v298 = vmul.f32 %v280, %v280
        %308 = vrot.lane.b32.xlu0 %v290, 127
        %v309 = vpop.permute.xlu0 %308
        %310 = vrot.lane.b32.xlu0 %v291, 127
        %v311 = vpop.permute.xlu0 %310
        %312 = vrot.lane.b32.xlu0 %v292, 127
        %v313 = vpop.permute.xlu0 %312
        %314 = vrot.lane.b32.xlu0 %v293, 127
        %v315 = vpop.permute.xlu0 %314
        %316 = vrot.lane.b32.xlu0 %v294, 127
        %v317 = vpop.permute.xlu0 %316
        %318 = vrot.lane.b32.xlu0 %v295, 127
        %v319 = vpop.permute.xlu0 %318
        %320 = vrot.lane.b32.xlu0 %v296, 127
        %v321 = vpop.permute.xlu0 %320
        %322 = vrot.lane.b32.xlu0 %v297, 127
        %v323 = vpop.permute.xlu0 %322
        %324 = vrot.lane.b32.xlu0 %v298, 127
        %v325 = vpop.permute.xlu0 %324
        %v335 = vadd.f32 %v281, %v309
        %v336 = vadd.f32 %v282, %v311
        %v337 = vadd.f32 %v283, %v313
        %v338 = vadd.f32 %v284, %v315
        %v339 = vadd.f32 %v285, %v317
        %v340 = vadd.f32 %v286, %v319
        %v341 = vadd.f32 %v287, %v321
        %v342 = vadd.f32 %v288, %v323
        %v343 = vadd.f32 %v289, %v325
        %v344 = vadd.f32 %v335, 1e-06
        %v345 = vadd.f32 %v336, 1e-06
        %v346 = vadd.f32 %v337, 1e-06
        %v347 = vadd.f32 %v338, 1e-06
        %v348 = vadd.f32 %v339, 1e-06
        %v349 = vadd.f32 %v340, 1e-06
        %v350 = vadd.f32 %v341, 1e-06
        %v351 = vadd.f32 %v342, 1e-06
        %v352 = vadd.f32 %v343, 1e-06
        %v353 = vrsqrt.pop %v344
        %v354 = vmul.f32 %v344, %v353
        %vm355 = vcmp.eq.f32.partialorder %v344, inf
        %v356 = vsel %vm355, %v344, %v354
        %vm357 = vcmp.eq.f32.partialorder %v344, 0.0
        %v358 = vand.u32 %v344, 2147483648
        %v359 = vsel %vm357, %v358, %v356
        %v360 = vrsqrt.pop %v345
        %v361 = vmul.f32 %v345, %v360
        %vm362 = vcmp.eq.f32.partialorder %v345, inf
        %v363 = vsel %vm362, %v345, %v361
        %vm364 = vcmp.eq.f32.partialorder %v345, 0.0
        %v365 = vand.u32 %v345, 2147483648
        %v366 = vsel %vm364, %v365, %v363
        %v367 = vrsqrt.pop %v346
        %v368 = vmul.f32 %v346, %v367
        %vm369 = vcmp.eq.f32.partialorder %v346, inf
        %v370 = vsel %vm369, %v346, %v368
        %vm371 = vcmp.eq.f32.partialorder %v346, 0.0
        %v372 = vand.u32 %v346, 2147483648
        %v373 = vsel %vm371, %v372, %v370
        %v374 = vrsqrt.pop %v347
        %v375 = vmul.f32 %v347, %v374
        %vm376 = vcmp.eq.f32.partialorder %v347, inf
        %v377 = vsel %vm376, %v347, %v375
        %vm378 = vcmp.eq.f32.partialorder %v347, 0.0
        %v379 = vand.u32 %v347, 2147483648
        %v380 = vsel %vm378, %v379, %v377
        %v381 = vrsqrt.pop %v348
        %v382 = vmul.f32 %v348, %v381
        %vm383 = vcmp.eq.f32.partialorder %v348, inf
        %v384 = vsel %vm383, %v348, %v382
        %vm385 = vcmp.eq.f32.partialorder %v348, 0.0
        %v386 = vand.u32 %v348, 2147483648
        %v387 = vsel %vm385, %v386, %v384
        %v388 = vrsqrt.pop %v349
        %v389 = vmul.f32 %v349, %v388
        %vm390 = vcmp.eq.f32.partialorder %v349, inf
        %v391 = vsel %vm390, %v349, %v389
        %vm392 = vcmp.eq.f32.partialorder %v349, 0.0
        %v393 = vand.u32 %v349, 2147483648
        %v394 = vsel %vm392, %v393, %v391
        %v395 = vrsqrt.pop %v350
        %v396 = vmul.f32 %v350, %v395
        %vm397 = vcmp.eq.f32.partialorder %v350, inf
        %v398 = vsel %vm397, %v350, %v396
        %vm399 = vcmp.eq.f32.partialorder %v350, 0.0
        %v400 = vand.u32 %v350, 2147483648
        %v401 = vsel %vm399, %v400, %v398
        %v402 = vrsqrt.pop %v351
        %v403 = vmul.f32 %v351, %v402
        %vm404 = vcmp.eq.f32.partialorder %v351, inf
        %v405 = vsel %vm404, %v351, %v403
        %vm406 = vcmp.eq.f32.partialorder %v351, 0.0
        %v407 = vand.u32 %v351, 2147483648
        %v408 = vsel %vm406, %v407, %v405
        %v409 = vrsqrt.pop %v352
        %v410 = vmul.f32 %v352, %v409
        %vm411 = vcmp.eq.f32.partialorder %v352, inf
        %v412 = vsel %vm411, %v352, %v410
        %vm413 = vcmp.eq.f32.partialorder %v352, 0.0
        %v414 = vand.u32 %v352, 2147483648
        %v415 = vsel %vm413, %v414, %v412
        %425 = vrot.lane.b32.xlu0 %v359, 127
        %v426 = vpop.permute.xlu0 %425
        %427 = vrot.lane.b32.xlu0 %v366, 127
        %v428 = vpop.permute.xlu0 %427
        %429 = vrot.lane.b32.xlu0 %v373, 127
        %v430 = vpop.permute.xlu0 %429
        %431 = vrot.lane.b32.xlu0 %v380, 127
        %v432 = vpop.permute.xlu0 %431
        %433 = vrot.lane.b32.xlu0 %v387, 127
        %v434 = vpop.permute.xlu0 %433
        %435 = vrot.lane.b32.xlu0 %v394, 127
        %v436 = vpop.permute.xlu0 %435
        %437 = vrot.lane.b32.xlu0 %v401, 127
        %v438 = vpop.permute.xlu0 %437
        %439 = vrot.lane.b32.xlu0 %v408, 127
        %v440 = vpop.permute.xlu0 %439
        %441 = vrot.lane.b32.xlu0 %v415, 127
        %v442 = vpop.permute.xlu0 %441
        %vm452 = vcmask 146432
        %453 = vst.msk [vmem:[%s140] sm:$0xff] %vm452, %v426
        %454 = vst.msk [vmem:[%s140 + $0x8] sm:$0xff] %vm452, %v428
        %vm455 = vcmask 140288
        %456 = vst.msk [vmem:[%s140 + $0x10] sm:$0x3] %vm455, %v430
        %457 = vst.msk [vmem:[%s140 + $0x18] sm:$0xff] %vm452, %v432
        %458 = vst.msk [vmem:[%s140 + $0x20] sm:$0xff] %vm452, %v434
        %459 = vst.msk [vmem:[%s140 + $0x28] sm:$0x3] %vm455, %v436
        %460 = vst.msk [vmem:[%s140 + $0x30] sm:$0xff] %vm452, %v438
        %461 = vst.msk [vmem:[%s140 + $0x38] sm:$0xff] %vm452, %v440
        %462 = vst.msk [vmem:[%s140 + $0x40] sm:$0x3] %vm455, %v442
        %s463 = smul.u32 3, %s15
        %p464 = scmp.lt.s32.totalorder %s463, 5
        %s465 = scalar_select %p464, %s463, 5
        %s466 = smul.addr %s465, 3
        %s467 = smul.addr %s466, 8
        %s468 = scalar_lea.vmem %s1, %s467
        // Predicated region
        $region29: #{get_gradient.1} parent=23 // pred_check
          %p469 = pneg %p59
        $region30: #{get_gradient.1} parent=23 // pred_check_branch
          %471 = sbr.rel (%p469) target = $region32
        $region31: #{get_gradient.1} parent=23 // pred_region
          %s472 = smul.u32 3, %s15
        $region32: #{get_gradient.1} parent=23 // pred_fallthru
          _
      $region24: #{get_gradient.1} parent=5 // pred_fallthru
        _
      %p473 = scmp.le.s32.totalorder 2, %s10
      // Predicated region
      $region33: #{get_gradient.1} parent=5 // pred_check
        %p474 = pneg %p473
      $region34: #{get_gradient.1} parent=5 // pred_check_branch
        %476 = sbr.rel (%p474) target = $region36
      $region35: #{get_gradient.1} parent=5 // pred_region
        %s477 = ssub.s32 %s10, 2
        // Predicated region
        $region37: #{get_gradient.1} parent=35 // pred_check
          %p478 = pneg %p65
        $region38: #{get_gradient.1} parent=35 // pred_check_branch
          %480 = sbr.rel (%p478) target = $region40
        $region39: #{get_gradient.1} parent=35 // pred_region
          %s481 = smul.u32 3, %s16
          %p482 = scmp.lt.s32.totalorder %s481, 5
          %s483 = scalar_select %p482, %s481, 5
          %s484 = smul.addr %s483, 3
          %s485 = smul.addr %s484, 8
          %s486 = scalar_lea.vmem %s1, %s485
        $region40: #{get_gradient.1} parent=35 // pred_fallthru
          _
      $region36: #{get_gradient.1} parent=5 // pred_fallthru
        _
    $region6: #{get_gradient.1} parent=1 // loop_footer
      %s14 = sadd.s32 1, %s10
    $region7: #{get_gradient.1} parent=1 // loop_footer_branch
      %9 = sbr.rel target = $region3
    $region8: #{get_gradient.1} parent=1 // loop_exit
      _
    %487 = vsyncpa [#allocation4], 1
    %s488 = scalar_lea.sflag [#allocation4], 1
    %489 = vsyncpa %s488, 1

</llo_original>
